<compile_context>
chip_gen: v5e
topology: v5e:2x2
jax: 0.10.0
libtpu: 0.0.40
codegen_flags: <defaults>
</compile_context>

<pallas_src>
import functools
import math

import jax
import jax.numpy as jnp
from jax.experimental import pallas as pl
from jax.experimental.pallas import tpu as pltpu


# Conservative scoped-VMEM budget: below v7x's 64 MiB physical, well within
# v5e/v6e's 128 MiB. With block_m<=512, hidden<=256, vocab<=4096 the resident
# (double-buffered) weights + tiles stay well under this.
_VMEM_LIMIT_BYTES = 48 * 1024 * 1024


# ----------------------------------------------------------------------------
# Small helpers: padding to TPU-friendly (lane-dense) shapes
# ----------------------------------------------------------------------------
def _round_up(v, m):
    return ((v + m - 1) // m) * m


def _pad_axis(x, axis, target):
    pad = target - x.shape[axis]
    if pad == 0:
        return x
    widths = [(0, 0)] * x.ndim
    widths[axis] = (0, pad)
    return jnp.pad(x, widths)


def _pick_block_m(m, cap=512):
    """Block along M: multiple of 16 (bf16 sublane packing), capped at 512.

    For M larger than one block we always produce >= 2 grid steps so the
    'parallel' grid axis can shard across both TensorCores on v7x (no-op on
    single-TC v5e/v6e)."""
    m16 = _round_up(max(m, 16), 16)
    if m16 <= 16:
        return 16
    half = _round_up((m16 + 1) // 2, 16)
    return min(cap, half)


def _prepare_padded_input(x2d, k_pad):
    """Pad [M, K] -> [M_pad, K_pad] and cast to bf16. Returns (x_p, M, block_m)."""
    M = x2d.shape[0]
    block_m = _pick_block_m(M)
    m_pad = _round_up(M, block_m)
    x_p = _pad_axis(_pad_axis(x2d, 1, k_pad), 0, m_pad).astype(jnp.bfloat16)
    return x_p, M, block_m


# ----------------------------------------------------------------------------
# Pallas kernels
# ----------------------------------------------------------------------------
def _linear_kernel(x_ref, w_ref, b_ref, o_ref, *, apply_relu):
    # bf16 operands -> MXU, f32 accumulation; bias add + ReLU in f32.
    y = jnp.dot(x_ref[...], w_ref[...], preferred_element_type=jnp.float32)
    y = y + b_ref[...]
    if apply_relu:
        y = jnp.maximum(y, 0.0)
    o_ref[...] = y.astype(o_ref.dtype)          # bf16 writeback (half the bytes)


def _fused_mlp_kernel(*refs, num_layers):
    # refs = (x_ref, w1, b1, w2, b2, ..., wL, bL, o_ref)
    x_ref = refs[0]
    o_ref = refs[-1]
    h = x_ref[...]                               # bf16 input tile
    for i in range(num_layers):
        w_ref = refs[1 + 2 * i]
        b_ref = refs[2 + 2 * i]
        y = jnp.dot(h.astype(w_ref.dtype), w_ref[...],
                    preferred_element_type=jnp.float32)
        y = y + b_ref[...]
        if i < num_layers - 1:
            y = jnp.maximum(y, 0.0)
        h = y                                    # stays in VMEM / vregs
    o_ref[...] = h.astype(o_ref.dtype)           # bf16 writeback


# ----------------------------------------------------------------------------
# Wrappers: padded-in, padded-out (no post-kernel slicing inside the wrapper)
# ----------------------------------------------------------------------------
def linear_pallas_padded(x_p, w_pad, b_pad, block_m, *, relu=False):
    """x_p: [M_pad, K_pad] bf16; w_pad: [K_pad, N_pad] bf16; b_pad: [1, N_pad] f32.
    Returns padded, lane-dense [M_pad, N_pad] bf16."""
    m_pad, k_pad = x_p.shape
    _, n_pad = w_pad.shape
    cost = pl.CostEstimate(
        flops=2 * m_pad * k_pad * n_pad,
        transcendentals=0,
        bytes_accessed=(m_pad * k_pad * 2 + k_pad * n_pad * 2
                        + n_pad * 4 + m_pad * n_pad * 2),
    )
    return pl.pallas_call(
        functools.partial(_linear_kernel, apply_relu=relu),
        out_shape=jax.ShapeDtypeStruct((m_pad, n_pad), jnp.bfloat16),
        grid_spec=pltpu.PrefetchScalarGridSpec(
            num_scalar_prefetch=0,
            grid=(m_pad // block_m,),
            in_specs=[
                pl.BlockSpec((block_m, k_pad), lambda i: (i, 0)),   # x tile
                pl.BlockSpec((k_pad, n_pad), lambda i: (0, 0)),     # weight (resident)
                pl.BlockSpec((1, n_pad), lambda i: (0, 0)),         # bias (resident)
            ],
            out_specs=pl.BlockSpec((block_m, n_pad), lambda i: (i, 0)),
        ),
        compiler_params=pltpu.CompilerParams(
            dimension_semantics=("parallel",),
            vmem_limit_bytes=_VMEM_LIMIT_BYTES,
        ),
        cost_estimate=cost,
    )(x_p, w_pad, b_pad)


def fused_mlp_pallas_padded(x_p, weights, biases, block_m):
    """Fused (Linear+ReLU)*(L-1), Linear head in ONE pallas_call.

    x_p: [M_pad, K_pad] bf16; weights[i]: [Ki_pad, Ni_pad] bf16;
    biases[i]: [1, Ni_pad] f32. Returns padded [M_pad, N_last_pad] bf16."""
    m_pad, k_pad = x_p.shape
    n_pad = weights[-1].shape[1]
    num_layers = len(weights)

    in_specs = [pl.BlockSpec((block_m, k_pad), lambda i: (i, 0))]
    operands = [x_p]
    flops = 0
    bytes_acc = m_pad * k_pad * 2 + m_pad * n_pad * 2
    for w, b in zip(weights, biases):
        in_specs.append(pl.BlockSpec(w.shape, lambda i: (0, 0)))
        in_specs.append(pl.BlockSpec(b.shape, lambda i: (0, 0)))
        operands.append(w)
        operands.append(b)
        flops += 2 * m_pad * w.shape[0] * w.shape[1]
        bytes_acc += w.size * 2 + b.size * 4

    # TODO(synk): for very large vocab (>= 32K) on v7x, add a second 'parallel'
    # grid axis tiling N (1024-2048) instead of one resident last-layer weight.
    return pl.pallas_call(
        functools.partial(_fused_mlp_kernel, num_layers=num_layers),
        out_shape=jax.ShapeDtypeStruct((m_pad, n_pad), jnp.bfloat16),
        grid_spec=pltpu.PrefetchScalarGridSpec(
            num_scalar_prefetch=0,
            grid=(m_pad // block_m,),
            in_specs=in_specs,
            out_specs=pl.BlockSpec((block_m, n_pad), lambda i: (i, 0)),
        ),
        compiler_params=pltpu.CompilerParams(
            dimension_semantics=("parallel",),
            vmem_limit_bytes=_VMEM_LIMIT_BYTES,
        ),
        cost_estimate=pl.CostEstimate(flops=flops, transcendentals=0,
                                      bytes_accessed=bytes_acc),
    )(*operands)


# ----------------------------------------------------------------------------
# Parameter construction (deterministic, in-script; nn.Linear-style init)
# ----------------------------------------------------------------------------
def _init_linear_padded(key, in_dim, out_dim):
    """Uniform +-1/sqrt(in_dim) init; returns (W^T padded bf16, bias padded f32)."""
    kw, kb = jax.random.split(key)
    bound = 1.0 / math.sqrt(in_dim)
    w = jax.random.uniform(kw, (in_dim, out_dim), jnp.float32, -bound, bound)
    b = jax.random.uniform(kb, (1, out_dim), jnp.float32, -bound, bound)
    k_pad = _round_up(in_dim, 128)
    n_pad = _round_up(out_dim, 128)
    w_pad = _pad_axis(_pad_axis(w, 0, k_pad), 1, n_pad).astype(jnp.bfloat16)
    b_pad = _pad_axis(b, 1, n_pad)  # keep f32 for the f32 epilogue add
    return w_pad, b_pad


class MLPPallas:
    """3-layer MLP (Linear+ReLU, Linear+ReLU, Linear) — fused in one Pallas kernel."""

    def __init__(self, key, input_dim, hidden_dim, output_dim, num_layers):
        self.num_layers = num_layers
        self.output_dim = output_dim
        h = [hidden_dim] * (num_layers - 1)
        dims = list(zip([input_dim] + h, h + [output_dim]))
        keys = jax.random.split(key, num_layers)
        self.weights, self.biases = [], []
        for k, (n_in, n_o) in zip(keys, dims):
            w, b = _init_linear_padded(k, n_in, n_o)
            self.weights.append(w)
            self.biases.append(b)

    def __call__(self, x):
        lead = x.shape[:-1]
        x2d = x.reshape(-1, x.shape[-1])
        x_p, M, block_m = _prepare_padded_input(x2d, self.weights[0].shape[0])
        out_pad = fused_mlp_pallas_padded(x_p, self.weights, self.biases, block_m)
        # Slice once to the logical shape (module semantics). Consumers that
        # can mask the padded vocab columns should use the padded path instead.
        y = out_pad[:M, :self.output_dim].astype(jnp.float32)
        return y.reshape(*lead, self.output_dim)


class SEQTRACKPallas:
    """JAX/Pallas port of SEQTRACK (decoder path; encoder/decoder are external)."""

    def __init__(self, key, encoder_num_channels, hidden_dim, bins=1000,
                 num_patch_x=16, num_patch_z=16, feature_type='x',
                 num_frames=1, num_template=1):
        self.num_patch_x = num_patch_x
        self.num_patch_z = num_patch_z
        self.side_fx = int(math.sqrt(self.num_patch_x))
        self.side_fz = int(math.sqrt(self.num_patch_z))
        self.hidden_dim = hidden_dim
        self.num_frames = num_frames
        self.num_template = num_template
        self.feature_type = feature_type

        k_bottleneck, k_mlp = jax.random.split(key)
        self.bottleneck_w, self.bottleneck_b = _init_linear_padded(
            k_bottleneck, encoder_num_channels, hidden_dim)
        self.vocab_embed = MLPPallas(k_mlp, hidden_dim, hidden_dim, bins + 2, 3)

    # --- forward dispatch (mirrors SEQTRACK.forward) -------------------------
    def __call__(self, z_list=None, x_list=None, xz=None, seq=None, mode='encoder'):
        if mode == 'encoder':
            return self.forward_encoder(z_list, x_list)
        elif mode == 'decoder':
            return self.forward_decoder(xz, seq)
        else:
            raise ValueError

    def forward_encoder(self, z_list, x_list):
        # TODO(synk): `self.encoder` is an injected external torch module (ViT
        # backbone) not defined in the reference file; no Pallas equivalent here.
        raise NotImplementedError("external encoder module")

    def _prep_sequence(self, sequence_list):
        # sequence = torch.stack(sequence_list, 0).permute(1,0,2,3,4).squeeze(0)
        sequence = jnp.stack(sequence_list, 0)
        sequence = jnp.transpose(sequence, (1, 0, 2, 3, 4))
        if sequence.shape[0] == 1:          # torch .squeeze(0) semantics
            sequence = jnp.squeeze(sequence, axis=0)
        return sequence

    def forward_decoder(self, xz, sequence_list):
        B, _, _ = xz.shape
        dec_mem = xz[:, -self.num_patch_x:, :]
        sequence = self._prep_sequence(sequence_list)

        if dec_mem.shape[-1] != self.hidden_dim:
            x2d = dec_mem.reshape(-1, dec_mem.shape[-1])
            x_p, M, block_m = _prepare_padded_input(x2d, self.bottleneck_w.shape[0])
            h_pad = linear_pallas_padded(x_p, self.bottleneck_w, self.bottleneck_b,
                                         block_m)
            dec_mem = (h_pad[:M, :self.hidden_dim].astype(jnp.float32)
                       .reshape(B, self.num_patch_x, self.hidden_dim))

        # TODO(synk): `self.decoder` is an injected external torch module (seq
        # decoder) not defined in the reference file; treated as identity here.
        out = dec_mem
        del sequence  # consumed only by the external decoder
        return out

    def forward_decoder_with_head(self, xz, sequence_list):
        """Perf path: bottleneck -> vocab_embed chained in the padded bf16
        layout (no f32 write / slice / re-pad between the two Pallas calls)."""
        B, _, _ = xz.shape
        dec_mem = xz[:, -self.num_patch_x:, :]
        sequence = self._prep_sequence(sequence_list)

        x2d = dec_mem.reshape(-1, dec_mem.shape[-1])
        if dec_mem.shape[-1] != self.hidden_dim:
            x_p, M, block_m = _prepare_padded_input(x2d, self.bottleneck_w.shape[0])
            h_pad = linear_pallas_padded(x_p, self.bottleneck_w, self.bottleneck_b,
                                         block_m)          # [M_pad, hidden_pad] bf16
        else:
            h_pad, M, block_m = _prepare_padded_input(
                x2d, self.vocab_embed.weights[0].shape[0])

        # TODO(synk): external decoder module would run between bottleneck and head.
        logits_pad = fused_mlp_pallas_padded(
            h_pad, self.vocab_embed.weights, self.vocab_embed.biases, block_m)
        vocab = self.vocab_embed.output_dim
        logits = logits_pad[:M, :vocab].astype(jnp.float32)
        del sequence
        return logits.reshape(B, self.num_patch_x, vocab)


# ----------------------------------------------------------------------------
# Demo
# ----------------------------------------------------------------------------
if __name__ == "__main__":
    key = jax.random.PRNGKey(0)
    k_xz, k_seq, k_params = jax.random.split(key, 3)

    # Small, SEQTRACK-consistent shapes.
    B = 2
    enc_channels = 64          # encoder.num_channels (!= hidden_dim -> bottleneck used)
    hidden_dim = 32
    bins = 10                  # vocab = bins + 2 = 12
    num_patch_x = 16           # side_fx = 4
    num_patch_z = 16
    seq_len = 8

    # xz: encoder feature [B, num_patch_z + num_patch_x, enc_channels]
    xz = jax.random.normal(k_xz, (B, num_patch_z + num_patch_x, enc_channels),
                           dtype=jnp.float32)
    # sequence_list: one 4-D tensor per frame (stack -> 5-D -> permute -> squeeze)
    sequence_list = [
        jax.random.randint(k_seq, (1, B, seq_len, 4), 0, bins + 2).astype(jnp.int32)
    ]

    model = SEQTRACKPallas(k_params, enc_channels, hidden_dim, bins=bins,
                           num_patch_x=num_patch_x, num_patch_z=num_patch_z)

    # 1) Decoder path (bottleneck Linear in a Pallas kernel) — module semantics.
    dec_mem = model(xz=xz, seq=sequence_list, mode='decoder')
    dec_mem = jax.block_until_ready(dec_mem)
    assert dec_mem.shape == (B, num_patch_x, hidden_dim)

    # 2) Prediction head owned by SEQTRACK (3-layer MLP fused in ONE Pallas kernel).
    logits = model.vocab_embed(dec_mem)
    logits = jax.block_until_ready(logits)
    assert logits.shape == (B, num_patch_x, bins + 2)

    # 3) Chained perf path: bottleneck -> head staying in padded bf16 layout.
    logits_fast = model.forward_decoder_with_head(xz, sequence_list)
    logits_fast = jax.block_until_ready(logits_fast)
    assert logits_fast.shape == (B, num_patch_x, bins + 2)

    print("KERNEL_OK")
</pallas_src>

<mosaic_0001>
module attributes {stable_mosaic.version = 11 : i64} {
  func.func @_linear_kernel(%arg0: i32, %arg1: memref<16x128xbf16, #tpu.memory_space<vmem>>, %arg2: memref<128x128xbf16, #tpu.memory_space<vmem>>, %arg3: memref<1x128xf32, #tpu.memory_space<vmem>>, %arg4: memref<16x128xbf16, #tpu.memory_space<vmem>>) attributes {dimension_semantics = [#tpu.dimension_semantics<parallel>], iteration_bounds = array<i64: 2>, scalar_prefetch = 0 : i64, scratch_operands = 0 : i64, tpu.core_type = #tpu.core_type<tc>, window_params = [{transform_indices = @transform_0, window_bounds = array<i64: 16, 128>}, {pipeline_mode = #tpu.pipeline_mode<synchronous>, transform_indices = @transform_1, window_bounds = array<i64: 128, 128>}, {pipeline_mode = #tpu.pipeline_mode<synchronous>, transform_indices = @transform_2, window_bounds = array<i64: 1, 128>}, {transform_indices = @transform_3, window_bounds = array<i64: 16, 128>}]} {
    %c0 = arith.constant 0 : index
    %c0_0 = arith.constant 0 : index
    %0 = vector.load %arg1[%c0, %c0_0] : memref<16x128xbf16, #tpu.memory_space<vmem>>, vector<16x128xbf16>
    %c0_1 = arith.constant 0 : index
    %c0_2 = arith.constant 0 : index
    %1 = vector.load %arg2[%c0_1, %c0_2] : memref<128x128xbf16, #tpu.memory_space<vmem>>, vector<128x128xbf16>
    %cst = arith.constant dense<0.000000e+00> : vector<16x128xf32>
    %2 = tpu.matmul %0, %1, %cst {dimension_numbers = #tpu.dot_dimension_numbers<[1], [0], [0], [1], [0, 0, 1, 1], [], []>} : vector<16x128xbf16>, vector<128x128xbf16>, vector<16x128xf32> -> vector<16x128xf32>
    %c0_3 = arith.constant 0 : index
    %c0_4 = arith.constant 0 : index
    %3 = vector.load %arg3[%c0_3, %c0_4] : memref<1x128xf32, #tpu.memory_space<vmem>>, vector<1x128xf32>
    %4 = vector.broadcast %3 : vector<1x128xf32> to vector<16x128xf32>
    %5 = arith.addf %2, %4 : vector<16x128xf32>
    %6 = arith.truncf %5 : vector<16x128xf32> to vector<16x128xbf16>
    %c0_5 = arith.constant 0 : index
    %c0_6 = arith.constant 0 : index
    %7 = vector.load %arg4[%c0_5, %c0_6] : memref<16x128xbf16, #tpu.memory_space<vmem>>, vector<16x128xbf16>
    tpu.vector_store %arg4[%c0_5, %c0_6], %6 {strides = array<i32>} : memref<16x128xbf16, #tpu.memory_space<vmem>>, vector<16x128xbf16>,
    return
  }
  func.func @transform_0(%arg0: i32) -> (i32, i32) {
    %c0_i32 = arith.constant 0 : i32
    %c0_i32_0 = arith.constant 0 : i32
    return %arg0, %c0_i32 : i32, i32
  }
  func.func @transform_1(%arg0: i32) -> (i32, i32) {
    %c0_i32 = arith.constant 0 : i32
    %c0_i32_0 = arith.constant 0 : i32
    %c0_i32_1 = arith.constant 0 : i32
    return %c0_i32, %c0_i32_0 : i32, i32
  }
  func.func @transform_2(%arg0: i32) -> (i32, i32) {
    %c0_i32 = arith.constant 0 : i32
    %c0_i32_0 = arith.constant 0 : i32
    %c0_i32_1 = arith.constant 0 : i32
    return %c0_i32, %c0_i32_0 : i32, i32
  }
  func.func @transform_3(%arg0: i32) -> (i32, i32) {
    %c0_i32 = arith.constant 0 : i32
    %c0_i32_0 = arith.constant 0 : i32
    return %arg0, %c0_i32 : i32, i32
  }
}

</mosaic_0001>

<llo_original>
// kernel: tpu_custom_call.1
$region0: #{tpu_custom_call.1}
  #allocation0 [shape = 'u32[]', space=smem, size = 0x4, offset = 0x4, fixed_abs, tag = 'smem constant byte address 0x4 - core index']
  #allocation1 [shape = 'u32[72,128]{1,0:T(1,128)}', space=vmem, size = 0x9000, scoped, tag = 'internal scratch']
  %s0 = inlined_call_operand.hbm [shape: bf16[32,128], index: 0, kind: input, shape index: {}]
  %s1 = inlined_call_operand.hbm [shape: bf16[128,128], index: 1, kind: input, shape index: {}]
  %s2 = inlined_call_operand.vmem [shape: f32[1,128], index: 2, kind: input, shape index: {}]
  %s3 = inlined_call_operand.hbm [shape: bf16[32,128], index: 3, kind: output, shape index: {}]
  %s4 = sld [smem:[#allocation0]]
  $region53: #{tpu_custom_call.1} parent=0
    _
  %s6 = ssub.s32 1, %s4
  %s7 = scalar_select 0, %s6, %s4
  $region1: #{tpu_custom_call.1} parent=0
    #allocation2 [shape = 'u8[8192]{0}', space=vmem, size = 0x2000, scoped, tag = 'input window, operand 0']
    #allocation3 [shape = 's32[2]{0}', space=sflag, size = 0x8, scoped, tag = 'scoped memory for tpu_custom_call.1']
    #allocation4 [shape = 's32[2]{0}', space=sflag, size = 0x8, scoped, tag = 'scoped memory for tpu_custom_call.1']
    #allocation5 [shape = 'u8[32768]{0}', space=vmem, size = 0x8000, scoped, tag = 'input window, operand 1, single buffered']
    #allocation6 [shape = 's32[1]{0}', space=sflag, size = 0x4, scoped, tag = 'scoped memory for tpu_custom_call.1']
    #allocation7 [shape = 'u8[8192]{0}', space=vmem, size = 0x2000, scoped, tag = 'output window, operand 0']
    %8 = vsyncpa [#allocation3], 0
    %s9 = scalar_lea.sflag [#allocation3], 1
    %10 = vsyncpa %s9, 0
    %11 = vsyncpa [#allocation6], 0
    %12 = vsyncpa [#allocation4], 0
    %s13 = scalar_lea.sflag [#allocation4], 1
    %14 = vsyncpa %s13, 0
    loop: start=0, step=1, limit=4
    $region2: #{tpu_custom_call.1} parent=1 // loop_pre_header
      _
    $region3: #{tpu_custom_call.1} parent=1 // loop_header
      %s16 = sphi 0, %s20
      %p17 = scmp.ge.s32.totalorder %s16, 4
      %s26 = sphi 0, %s28
      %s29 = sphi 0, %s26
      %s30 = sphi 0, %s29
      %s46 = sphi 0, %s30
      %s50 = sphi 0, %s50
      %s52 = sphi 0, %s50
      %s53 = sphi 0, %s52
      %s67 = sphi 0, %s53
      %s71 = sphi 0, %s71
      %s73 = sphi 0, %s71
      %s74 = sphi 0, %s73
      %s88 = sphi 0, %s74
      %s94 = sphi 0, %s96
      %s97 = sphi 0, %s94
      %s98 = sphi 0, %s97
      %s114 = sphi 0, %s98
    $region4: #{tpu_custom_call.1} parent=1 // loop_header_branch
      %19 = sbr.rel (%p17) target = $region8
    $region5: #{tpu_custom_call.1} parent=1 // loop_body
      %s21 = ssub.s32 %s16, 1
      %s22 = ssub.s32 %s16, 2
      %s23 = sadd.s32 %s16, 1
      %s24 = ssub.s32 %s16, %s23
      %p25 = scmp.eq.s32.totalorder %s24, 0
      %s27 = sadd.s32 %s26, 1
      %s28 = scalar_select %p25, %s26, %s27
      %p31 = pneg %p25
      %p32 = scmp.eq.s32.totalorder %s16, 1
      %p33 = por %p31, %p32
      %p34 = scmp.ne.s32.totalorder %s26, %s29
      %p35 = scmp.eq.s32.totalorder %s16, 0
      %p36 = por %p34, %p35
      %p37 = scmp.ne.s32.totalorder %s26, %s29
      %p38 = scmp.eq.s32.totalorder %s21, 1
      %p39 = por %p37, %p38
      %p40 = scmp.ne.s32.totalorder %s29, %s30
      %p41 = scmp.eq.s32.totalorder %s21, 0
      %p42 = por %p40, %p41
      %p43 = scmp.ne.s32.totalorder %s29, %s30
      %p44 = scmp.eq.s32.totalorder %s22, 1
      %p45 = por %p43, %p44
      %p47 = scmp.ne.s32.totalorder %s30, %s46
      %p48 = scmp.eq.s32.totalorder %s22, 0
      %p49 = por %p47, %p48
      %s51 = sadd.s32 %s50, 1
      %p54 = scmp.eq.s32.totalorder %s16, 1
      %p55 = scmp.ne.s32.totalorder %s50, %s52
      %p56 = scmp.eq.s32.totalorder %s16, 0
      %p57 = por %p55, %p56
      %p58 = scmp.ne.s32.totalorder %s50, %s52
      %p59 = scmp.eq.s32.totalorder %s21, 1
      %p60 = por %p58, %p59
      %p61 = scmp.ne.s32.totalorder %s52, %s53
      %p62 = scmp.eq.s32.totalorder %s21, 0
      %p63 = por %p61, %p62
      %p64 = scmp.ne.s32.totalorder %s52, %s53
      %p65 = scmp.eq.s32.totalorder %s22, 1
      %p66 = por %p64, %p65
      %p68 = scmp.ne.s32.totalorder %s53, %s67
      %p69 = scmp.eq.s32.totalorder %s22, 0
      %p70 = por %p68, %p69
      %s72 = sadd.s32 %s71, 1
      %p75 = scmp.eq.s32.totalorder %s16, 1
      %p76 = scmp.ne.s32.totalorder %s71, %s73
      %p77 = scmp.eq.s32.totalorder %s16, 0
      %p78 = por %p76, %p77
      %p79 = scmp.ne.s32.totalorder %s71, %s73
      %p80 = scmp.eq.s32.totalorder %s21, 1
      %p81 = por %p79, %p80
      %p82 = scmp.ne.s32.totalorder %s73, %s74
      %p83 = scmp.eq.s32.totalorder %s21, 0
      %p84 = por %p82, %p83
      %p85 = scmp.ne.s32.totalorder %s73, %s74
      %p86 = scmp.eq.s32.totalorder %s22, 1
      %p87 = por %p85, %p86
      %p89 = scmp.ne.s32.totalorder %s74, %s88
      %p90 = scmp.eq.s32.totalorder %s22, 0
      %p91 = por %p89, %p90
      %s92 = ssub.s32 %s16, %s23
      %p93 = scmp.eq.s32.totalorder %s92, 0
      %s95 = sadd.s32 %s94, 1
      %s96 = scalar_select %p93, %s94, %s95
      %p99 = pneg %p93
      %p100 = scmp.eq.s32.totalorder %s16, 1
      %p101 = por %p99, %p100
      %p102 = scmp.ne.s32.totalorder %s94, %s97
      %p103 = scmp.eq.s32.totalorder %s16, 0
      %p104 = por %p102, %p103
      %p105 = scmp.ne.s32.totalorder %s94, %s97
      %p106 = scmp.eq.s32.totalorder %s21, 1
      %p107 = por %p105, %p106
      %p108 = scmp.ne.s32.totalorder %s97, %s98
      %p109 = scmp.eq.s32.totalorder %s21, 0
      %p110 = por %p108, %p109
      %p111 = scmp.ne.s32.totalorder %s97, %s98
      %p112 = scmp.eq.s32.totalorder %s22, 1
      %p113 = por %p111, %p112
      %p115 = scmp.ne.s32.totalorder %s98, %s114
      %p116 = scmp.eq.s32.totalorder %s22, 0
      %p117 = por %p115, %p116
      %p118 = scmp.le.s32.totalorder 1, %s16
      %p119 = scmp.lt.s32.totalorder %s16, 3
      %p120 = pnand %p118, %p119
      %p121 = pneg %p120
      // Predicated region
      $region9: #{tpu_custom_call.1} parent=5 // pred_check
        _
      $region10: #{tpu_custom_call.1} parent=5 // pred_check_branch
        %123 = sbr.rel (%p120) target = $region12
      $region11: #{tpu_custom_call.1} parent=5 // pred_region
        %s124 = ssub.s32 %s16, 1
        // Predicated region
        $region13: #{tpu_custom_call.1} parent=11 // pred_check
          %p125 = pneg %p63
        $region14: #{tpu_custom_call.1} parent=11 // pred_check_branch
          %127 = sbr.rel (%p125) target = $region16
        $region15: #{tpu_custom_call.1} parent=11 // pred_region
          %129 = vsyncadd [#allocation6], 0
          %s130 = sshll.u32 %s1, 4
          %s131 = int_to_ptr.hbm [resolvable:$true] %s130
          %s132 = sshll.u32 [#allocation5], 4
          %s133 = int_to_ptr.vmem [resolvable:$true] %s132
          %138 = dma.hbm_to_vmem [thread:$0]  %s131, 1024, %s133, [#allocation6], 64, 64, 4
        $region16: #{tpu_custom_call.1} parent=11 // pred_fallthru
          _
        // Predicated region
        $region17: #{tpu_custom_call.1} parent=11 // pred_check
          %p139 = pneg %p84
        $region18: #{tpu_custom_call.1} parent=11 // pred_check_branch
          %141 = sbr.rel (%p139) target = $region20
        $region19: #{tpu_custom_call.1} parent=11 // pred_region
          _
        $region20: #{tpu_custom_call.1} parent=11 // pred_fallthru
          _
      $region12: #{tpu_custom_call.1} parent=5 // pred_fallthru
        _
      %p142 = scmp.lt.s32.totalorder %s16, 2
      // Predicated region
      $region21: #{tpu_custom_call.1} parent=5 // pred_check
        %p143 = pneg %p142
      $region22: #{tpu_custom_call.1} parent=5 // pred_check_branch
        %145 = sbr.rel (%p143) target = $region24
      $region23: #{tpu_custom_call.1} parent=5 // pred_region
        // Predicated region
        $region25: #{tpu_custom_call.1} parent=23 // pred_check
          %p146 = pneg %p36
        $region26: #{tpu_custom_call.1} parent=23 // pred_check_branch
          %148 = sbr.rel (%p146) target = $region28
        $region27: #{tpu_custom_call.1} parent=23 // pred_region
          %s149 = sand.u32 %s26, 1
          %s150 = scalar_lea.sflag [#allocation3], %s149
          %s151 = sand.u32 %s26, 1
          %s152 = smul.addr %s151, 8
          %s153 = scalar_lea.vmem [#allocation2], %s152
          %s154 = smul.u32 2, %s16
          %156 = vsyncadd %s150, 0
          %s157 = smul.addr %s154, 4
          %s158 = scalar_lea.hbm %s0, %s157
          %s159 = sshll.u32 %s158, 4
          %s160 = int_to_ptr.hbm [resolvable:$true] %s159
          %s161 = sshll.u32 %s153, 4
          %s162 = int_to_ptr.vmem [resolvable:$true] %s161
          %167 = dma.hbm_to_vmem [thread:$0]  %s160, 128, %s162, %s150, 64, 64, 4
        $region28: #{tpu_custom_call.1} parent=23 // pred_fallthru
          _
      $region24: #{tpu_custom_call.1} parent=5 // pred_fallthru
        _
      %p168 = scmp.le.s32.totalorder 1, %s16
      %p169 = scmp.lt.s32.totalorder %s16, 3
      %p170 = pnand %p168, %p169
      %p171 = pneg %p170
      // Predicated region
      $region29: #{tpu_custom_call.1} parent=5 // pred_check
        _
      $region30: #{tpu_custom_call.1} parent=5 // pred_check_branch
        %173 = sbr.rel (%p170) target = $region32
      $region31: #{tpu_custom_call.1} parent=5 // pred_region
        %s174 = ssub.s32 %s16, 1
        %s175 = sand.u32 %s29, 1
        %s176 = scalar_lea.sflag [#allocation3], %s175
        %s177 = sand.u32 %s29, 1
        %s178 = smul.addr %s177, 8
        %s179 = scalar_lea.vmem [#allocation2], %s178
        // Predicated region
        $region33: #{tpu_custom_call.1} parent=31 // pred_check
          %p180 = pneg %p42
        $region34: #{tpu_custom_call.1} parent=31 // pred_check_branch
          %182 = sbr.rel (%p180) target = $region36
        $region35: #{tpu_custom_call.1} parent=31 // pred_region
          %184 = dma.done %s176, 128
        $region36: #{tpu_custom_call.1} parent=31 // pred_fallthru
          _
        // Predicated region
        $region37: #{tpu_custom_call.1} parent=31 // pred_check
          %p185 = pneg %p63
        $region38: #{tpu_custom_call.1} parent=31 // pred_check_branch
          %187 = sbr.rel (%p185) target = $region40
        $region39: #{tpu_custom_call.1} parent=31 // pred_region
          %189 = dma.done [#allocation6], 1024
        $region40: #{tpu_custom_call.1} parent=31 // pred_fallthru
          _
        %s190 = sand.u32 %s29, 1
        %s191 = scalar_lea.sflag [#allocation3], %s190
        %s192 = sand.u32 %s29, 1
        %s193 = smul.addr %s192, 8
        %s194 = scalar_lea.vmem [#allocation2], %s193
        %p195 = pneg %p42
        %p196 = pneg %p39
        %p197 = pneg %p63
        %p198 = pneg %p60
        %p199 = pneg %p84
        %p200 = pneg %p81
        %p201 = pneg %p110
        %p202 = pneg %p107
        %s203 = sand.u32 %s97, 1
        %s204 = scalar_lea.sflag [#allocation4], %s203
        %s205 = sand.u32 %s97, 1
        %s206 = smul.addr %s205, 8
        %s207 = scalar_lea.vmem [#allocation7], %s206
        %s208 = smul.u32 2, %s21
        %s209 = smul.u32 2, %s21
        %v210 = vld [vmem:[%s179] sm:$0xf]
        %v211 = vld [vmem:[%s179 + $0x4] sm:$0xf]
        %v212 = vld [vmem:[#allocation5] sm:$0xf]
        %v213 = vld [vmem:[#allocation5 + $0x4] sm:$0xf]
        %v214 = vld [vmem:[#allocation5 + $0x8] sm:$0xf]
        %v215 = vld [vmem:[#allocation5 + $0xc] sm:$0xf]
        %v216 = vld [vmem:[#allocation5 + $0x10] sm:$0xf]
        %v217 = vld [vmem:[#allocation5 + $0x14] sm:$0xf]
        %v218 = vld [vmem:[#allocation5 + $0x18] sm:$0xf]
        %v219 = vld [vmem:[#allocation5 + $0x1c] sm:$0xf]
        %v220 = vld [vmem:[#allocation5 + $0x20] sm:$0xf]
        %v221 = vld [vmem:[#allocation5 + $0x24] sm:$0xf]
        %v222 = vld [vmem:[#allocation5 + $0x28] sm:$0xf]
        %v223 = vld [vmem:[#allocation5 + $0x2c] sm:$0xf]
        %v224 = vld [vmem:[#allocation5 + $0x30] sm:$0xf]
        %v225 = vld [vmem:[#allocation5 + $0x34] sm:$0xf]
        %v226 = vld [vmem:[#allocation5 + $0x38] sm:$0xf]
        %v227 = vld [vmem:[#allocation5 + $0x3c] sm:$0xf]
        %v228 = vld [vmem:[%s2] sm:$0x1]
        %v230 = vperm.slane %v228, 0
        %v234 = vunpack.c.l.b16 %v210
        %v235 = vunpack.c.l.b16 %v211
        %v236 = vpack.c.b16 %v235, %v234
        %v254 = vunpack.c.l.b16 %v212
        %v255 = vunpack.c.l.b16 %v213
        %v256 = vunpack.c.l.b16 %v214
        %v257 = vunpack.c.l.b16 %v215
        %v258 = vunpack.c.l.b16 %v216
        %v259 = vunpack.c.l.b16 %v217
        %v260 = vunpack.c.l.b16 %v218
        %v261 = vunpack.c.l.b16 %v219
        %v262 = vunpack.c.l.b16 %v220
        %v263 = vunpack.c.l.b16 %v221
        %v264 = vunpack.c.l.b16 %v222
        %v265 = vunpack.c.l.b16 %v223
        %v266 = vunpack.c.l.b16 %v224
        %v267 = vunpack.c.l.b16 %v225
        %v268 = vunpack.c.l.b16 %v226
        %v269 = vunpack.c.l.b16 %v227
        %v270 = vpack.c.b16 %v255, %v254
        %v271 = vpack.c.b16 %v257, %v256
        %v272 = vpack.c.b16 %v259, %v258
        %v273 = vpack.c.b16 %v261, %v260
        %v274 = vpack.c.b16 %v263, %v262
        %v275 = vpack.c.b16 %v265, %v264
        %v276 = vpack.c.b16 %v267, %v266
        %v277 = vpack.c.b16 %v269, %v268
        %286 = vmatpush.bf16.msra.mxu0 %v277
        %287 = vmatpush.bf16.msra.mxu0 %v276
        %288 = vmatpush.bf16.msra.mxu0 %v275
        %289 = vmatpush.bf16.msra.mxu0 %v274
        %290 = vmatpush.bf16.msra.mxu0 %v273
        %291 = vmatpush.bf16.msra.mxu0 %v272
        %292 = vmatpush.bf16.msra.mxu0 %v271
        %293 = vmatpush.bf16.msra.mxu0 %v270
        %294 = vmatmul.bf16.gmra.mxu0 %v236
        %v295 = vpop.f32.mrf.mxu0
        %v296 = vadd.f32 %v230, %v295
        %v297 = vpop.f32.mrf.mxu0
        %v298 = vadd.f32 %v230, %v297
        %299 = vdwg.mxu0
        %v300 = vpack.c.bf16 %v296, %v296
        %v301 = vpack.c.bf16 %v298, %v298
        %302 = vst [vmem:[%s207] sm:$0xf] %v300
        %303 = vst [vmem:[%s207 + $0x4] sm:$0xf] %v301
        %s304 = sand.u32 %s97, 1
        %s305 = scalar_lea.sflag [#allocation4], %s304
        %s306 = sand.u32 %s97, 1
        %s307 = smul.addr %s306, 8
        %s308 = scalar_lea.vmem [#allocation7], %s307
        // Predicated region
        $region41: #{tpu_custom_call.1} parent=31 // pred_check
          %p309 = pneg %p107
        $region42: #{tpu_custom_call.1} parent=31 // pred_check_branch
          %311 = sbr.rel (%p309) target = $region44
        $region43: #{tpu_custom_call.1} parent=31 // pred_region
          %s312 = smul.u32 2, %s21
          %314 = vsyncadd %s305, 0
          %s315 = smul.addr %s312, 4
          %s316 = scalar_lea.hbm %s3, %s315
          %s317 = sshll.u32 %s308, 4
          %s318 = int_to_ptr.vmem [resolvable:$true] %s317
          %s319 = sshll.u32 %s316, 4
          %s320 = int_to_ptr.hbm [resolvable:$true] %s319
          %325 = dma.vmem_to_hbm [thread:$0]  %s318, 128, %s320, %s305, 64, 64, 4
        $region44: #{tpu_custom_call.1} parent=31 // pred_fallthru
          _
      $region32: #{tpu_custom_call.1} parent=5 // pred_fallthru
        _
      %p326 = scmp.le.s32.totalorder 2, %s16
      // Predicated region
      $region45: #{tpu_custom_call.1} parent=5 // pred_check
        %p327 = pneg %p326
      $region46: #{tpu_custom_call.1} parent=5 // pred_check_branch
        %329 = sbr.rel (%p327) target = $region48
      $region47: #{tpu_custom_call.1} parent=5 // pred_region
        %s330 = ssub.s32 %s16, 2
        // Predicated region
        $region49: #{tpu_custom_call.1} parent=47 // pred_check
          %p331 = pneg %p113
        $region50: #{tpu_custom_call.1} parent=47 // pred_check_branch
          %333 = sbr.rel (%p331) target = $region52
        $region51: #{tpu_custom_call.1} parent=47 // pred_region
          %s334 = sand.u32 %s98, 1
          %s335 = scalar_lea.sflag [#allocation4], %s334
          %s336 = sand.u32 %s98, 1
          %s337 = smul.addr %s336, 8
          %s338 = scalar_lea.vmem [#allocation7], %s337
          %340 = dma.done %s335, 128
        $region52: #{tpu_custom_call.1} parent=47 // pred_fallthru
          _
      $region48: #{tpu_custom_call.1} parent=5 // pred_fallthru
        _
    $region6: #{tpu_custom_call.1} parent=1 // loop_footer
      %s20 = sadd.s32 1, %s16
    $region7: #{tpu_custom_call.1} parent=1 // loop_footer_branch
      %15 = sbr.rel target = $region3
    $region8: #{tpu_custom_call.1} parent=1 // loop_exit
      _
    %341 = vsyncpa [#allocation3], 1
    %s342 = scalar_lea.sflag [#allocation3], 1
    %343 = vsyncpa %s342, 1
    %344 = vsyncpa [#allocation6], 1
    %345 = vsyncpa [#allocation4], 1
    %s346 = scalar_lea.sflag [#allocation4], 1
    %347 = vsyncpa %s346, 1

</llo_original>
